<compile_context>
chip_gen: v5e
topology: v5e:2x2
jax: 0.10.0
libtpu: 0.0.40
codegen_flags: <defaults>
</compile_context>

<pallas_src>
import functools

import jax
import jax.numpy as jnp
from jax.experimental import pallas as pl
from jax.experimental.pallas import tpu as pltpu

_NEG_SLOPE = 0.01  # PyTorch LeakyReLU default negative_slope


def _round_up(x, m):
    return (x + m - 1) // m * m


def _vmem_capacity_bytes():
    """Physical VMEM per core; conservative fallback = 64 MiB (v7x minimum)."""
    try:
        return int(pltpu.get_tpu_info().vmem_capacity_bytes)
    except Exception:
        return 64 * 1024 * 1024


def _make_fused_kernel(num_layers):
    """Kernel operating on one (1, C_in, TILE_N) input tile.

    Ref order: x_ref, (w0, b0), (w1, b1), ..., o_ref
      w_l: (C_out, C_in)  -- BN scale already folded in (f32 or bf16)
      b_l: (C_out, 1)     -- folded BN bias (beta - mean*scale), f32
    All intermediates stay in VMEM/vregs; only the x tile is read and the final
    output tile written to HBM.
    """

    def kernel(*refs):
        x_ref = refs[0]
        o_ref = refs[-1]
        h = x_ref[0]  # (C_in, TILE_N)
        for l in range(num_layers):
            w = refs[1 + 2 * l][...]
            b = refs[2 + 2 * l][...]
            y = jnp.dot(w, h.astype(w.dtype),
                        preferred_element_type=jnp.float32) + b
            h = jnp.maximum(y, _NEG_SLOPE * y)  # LeakyReLU(0.01), 0 < slope < 1
        o_ref[0] = h.astype(o_ref.dtype)

    return kernel


def make_folding_params(in_channels, out_channels, key, eps=1e-5):
    """Deterministic params matching the module's __init__ shapes.

    Returns list of (W_folded (C_out, C_in), bias (C_out, 1)) with the eval-mode
    BatchNorm scale folded into the conv weight.
    """
    params = []
    prev = in_channels
    for i, c_out in enumerate(out_channels):
        key, wkey = jax.random.split(key)
        w = (jax.random.normal(wkey, (c_out, prev), dtype=jnp.float32)
             * (1.0 / jnp.sqrt(jnp.float32(prev))))
        ch = jnp.arange(c_out, dtype=jnp.float32)
        gamma = 1.0 + 0.05 * jnp.cos(ch + i)
        beta = 0.02 * jnp.sin(ch - i)
        running_mean = 0.01 * ch
        running_var = 1.0 + 0.1 * (ch / jnp.maximum(c_out - 1, 1))
        scale = (gamma / jnp.sqrt(running_var + eps)).reshape(c_out, 1)
        bias = beta.reshape(c_out, 1) - running_mean.reshape(c_out, 1) * scale
        w_folded = w * scale  # fold BN scale into conv weight
        params.append((w_folded, bias))
        prev = c_out
    return params


@functools.partial(jax.jit, static_argnames=("tile_n", "use_bf16"))
def folding_forward(x, params, *, tile_n=None, use_bf16=None):
    """x: (B, C_in, N) float32, PyTorch NCW layout.  Returns (B, C_out_last, N)."""
    bsz, c_in, n = x.shape
    num_layers = len(params)
    c_outs = [int(w.shape[0]) for w, _ in params]
    c_last = c_outs[-1]

    # bf16 MXU operands pay off only when the chain is compute-bound (wide channels).
    if use_bf16 is None:
        use_bf16 = max([c_in] + c_outs) >= 256
    comp_dtype = jnp.bfloat16 if use_bf16 else jnp.float32
    w_itemsize = 2 if use_bf16 else 4

    # ---- generation-aware tile_n selection -----------------------------------
    vmem_cap = _vmem_capacity_bytes()
    # Resident params (pipeline double-buffers them: x2).
    w_bytes = 2 * sum(w.size * w_itemsize + bias.size * 4 for w, bias in params)
    # Widest pair of consecutive live activations inside the kernel (f32 columns).
    live_cols = max([c_in + c_outs[0]]
                    + [c_outs[i] + c_outs[i + 1] for i in range(num_layers - 1)])
    # Per-column bytes: double-buffered x/out tiles + live intermediates.
    per_col = 4 * (2 * c_in + 2 * c_last + live_cols)
    budget = int(0.4 * vmem_cap) - w_bytes - (2 << 20)  # headroom for Mosaic scratch
    budget = max(budget, 512 * 1024)
    max_tile = max(128, (budget // per_col) // 128 * 128)

    n_ceil = _round_up(n, 128)
    if tile_n is None:
        tile_n = min(4096, max_tile)
    tile_n = max(128, min(int(tile_n), max_tile, n_ceil))
    # v7x has 2 TensorCores: keep >=2 grid steps along a parallel axis when B == 1.
    if bsz == 1 and n_ceil >= 256:
        tile_n = min(tile_n, _round_up(pl.cdiv(n_ceil, 2), 128))
    tile_n = min(_round_up(tile_n, 128), n_ceil)

    grid = (bsz, pl.cdiv(n, tile_n))

    # ---- specs ---------------------------------------------------------------
    # Channel dims are full-extent blocks (no padding needed); N is 128-multiple tiled.
    in_specs = [pl.BlockSpec((1, c_in, tile_n), lambda bb, jj: (bb, 0, jj))]
    flat_inputs = [x]
    for w, bias in params:
        w_c = w.astype(comp_dtype)
        # Constant index_map -> weights/biases stay resident across grid steps.
        in_specs.append(pl.BlockSpec(w_c.shape, lambda bb, jj: (0, 0)))
        in_specs.append(pl.BlockSpec(bias.shape, lambda bb, jj: (0, 0)))
        flat_inputs += [w_c, bias]
    out_spec = pl.BlockSpec((1, c_last, tile_n), lambda bb, jj: (bb, 0, jj))

    # ---- VMEM budget / compiler params ----------------------------------------
    est = (2 * (c_in + c_last) * tile_n * 4      # double-buffered x/out tiles
           + live_cols * tile_n * 4              # live intermediate activations
           + w_bytes)                            # double-buffered resident params
    cp_kwargs = dict(dimension_semantics=("parallel", "parallel"))
    if est > 14 * 1024 * 1024:  # only raise above the smallest (v5e) scoped default
        cp_kwargs["vmem_limit_bytes"] = int(min(est * 1.5 + (4 << 20),
                                                0.85 * vmem_cap))

    flops = 2 * bsz * n * sum(w.shape[0] * w.shape[1] for w, _ in params)
    bytes_accessed = (bsz * c_in * n * 4 + bsz * c_last * n * 4
                      + sum(w.size * w_itemsize + bias.size * 4
                            for w, bias in params))
    cost = pl.CostEstimate(flops=flops, transcendentals=0,
                           bytes_accessed=bytes_accessed)

    return pl.pallas_call(
        _make_fused_kernel(num_layers),
        out_shape=jax.ShapeDtypeStruct((bsz, c_last, n), jnp.float32),
        grid=grid,
        in_specs=in_specs,
        out_specs=out_spec,
        compiler_params=pltpu.CompilerParams(**cp_kwargs),
        cost_estimate=cost,
    )(*flat_inputs)


def _reference_forward(x, params):
    """Pure-JAX reference (same eval-mode semantics) for correctness checking."""
    h = x
    for w, bias in params:
        y = jnp.einsum("oc,bcn->bon", w, h,
                       precision=jax.lax.Precision.HIGHEST) + bias[None]
        h = jnp.where(y > 0, y, _NEG_SLOPE * y)
    return h


if __name__ == "__main__":
    key = jax.random.PRNGKey(0)
    B, C_IN, N = 2, 8, 256
    OUT_CHANNELS = (32, 16, 4)

    key, xkey = jax.random.split(key)
    x = jax.random.normal(xkey, (B, C_IN, N), dtype=jnp.float32)
    params = make_folding_params(C_IN, OUT_CHANNELS, key)

    out = jax.block_until_ready(folding_forward(x, params))
    assert out.shape == (B, OUT_CHANNELS[-1], N), out.shape
    ref = _reference_forward(x, params)
    assert bool(jnp.allclose(out, ref, rtol=1e-3, atol=1e-3)), (
        float(jnp.max(jnp.abs(out - ref))))

    # Single-batch path: grid keeps >=2 parallel N tiles (both v7x TensorCores busy).
    x1 = x[:1]
    out1 = jax.block_until_ready(folding_forward(x1, params))
    ref1 = _reference_forward(x1, params)
    assert bool(jnp.allclose(out1, ref1, rtol=1e-3, atol=1e-3)), (
        float(jnp.max(jnp.abs(out1 - ref1))))

    print("KERNEL_OK")
</pallas_src>

<mosaic_0001>
module attributes {stable_mosaic.version = 11 : i64} {
  func.func @kernel(%arg0: i32, %arg1: i32, %arg2: memref<1x8x256xf32, #tpu.memory_space<vmem>>, %arg3: memref<32x8xf32, #tpu.memory_space<vmem>>, %arg4: memref<32x1xf32, #tpu.memory_space<vmem>>, %arg5: memref<16x32xf32, #tpu.memory_space<vmem>>, %arg6: memref<16x1xf32, #tpu.memory_space<vmem>>, %arg7: memref<4x16xf32, #tpu.memory_space<vmem>>, %arg8: memref<4x1xf32, #tpu.memory_space<vmem>>, %arg9: memref<1x4x256xf32, #tpu.memory_space<vmem>>) attributes {dimension_semantics = [#tpu.dimension_semantics<parallel>, #tpu.dimension_semantics<parallel>], iteration_bounds = array<i64: 2, 1>, scalar_prefetch = 0 : i64, scratch_operands = 0 : i64, tpu.core_type = #tpu.core_type<tc>, window_params = [{transform_indices = @transform_0, window_bounds = array<i64: 1, 8, 256>}, {pipeline_mode = #tpu.pipeline_mode<synchronous>, transform_indices = @transform_1, window_bounds = array<i64: 32, 8>}, {pipeline_mode = #tpu.pipeline_mode<synchronous>, transform_indices = @transform_2, window_bounds = array<i64: 32, 1>}, {pipeline_mode = #tpu.pipeline_mode<synchronous>, transform_indices = @transform_3, window_bounds = array<i64: 16, 32>}, {pipeline_mode = #tpu.pipeline_mode<synchronous>, transform_indices = @transform_4, window_bounds = array<i64: 16, 1>}, {pipeline_mode = #tpu.pipeline_mode<synchronous>, transform_indices = @transform_5, window_bounds = array<i64: 4, 16>}, {pipeline_mode = #tpu.pipeline_mode<synchronous>, transform_indices = @transform_6, window_bounds = array<i64: 4, 1>}, {transform_indices = @transform_7, window_bounds = array<i64: 1, 4, 256>}]} {
    %c0 = arith.constant 0 : index
    %c0_0 = arith.constant 0 : index
    %c0_1 = arith.constant 0 : index
    %0 = vector.load %arg2[%c0, %c0_0, %c0_1] : memref<1x8x256xf32, #tpu.memory_space<vmem>>, vector<1x8x256xf32>
    %1 = vector.shape_cast %0 : vector<1x8x256xf32> to vector<8x256xf32>
    %c0_2 = arith.constant 0 : index
    %c0_3 = arith.constant 0 : index
    %2 = vector.load %arg3[%c0_2, %c0_3] : memref<32x8xf32, #tpu.memory_space<vmem>>, vector<32x8xf32>
    %c0_4 = arith.constant 0 : index
    %c0_5 = arith.constant 0 : index
    %3 = vector.load %arg4[%c0_4, %c0_5] : memref<32x1xf32, #tpu.memory_space<vmem>>, vector<32x1xf32>
    %cst = arith.constant dense<0.000000e+00> : vector<32x256xf32>
    %4 = tpu.matmul %2, %1, %cst {dimension_numbers = #tpu.dot_dimension_numbers<[1], [0], [0], [1], [0, 0, 1, 1], [], []>} : vector<32x8xf32>, vector<8x256xf32>, vector<32x256xf32> -> vector<32x256xf32>
    %5 = vector.broadcast %3 : vector<32x1xf32> to vector<32x256xf32>
    %6 = arith.addf %4, %5 : vector<32x256xf32>
    %cst_6 = arith.constant 0.00999999977 : f32
    %7 = vector.broadcast %cst_6 : f32 to vector<32x256xf32>
    %8 = arith.mulf %7, %6 : vector<32x256xf32>
    %9 = arith.maximumf %6, %8 : vector<32x256xf32>
    %c0_7 = arith.constant 0 : index
    %c0_8 = arith.constant 0 : index
    %10 = vector.load %arg5[%c0_7, %c0_8] : memref<16x32xf32, #tpu.memory_space<vmem>>, vector<16x32xf32>
    %c0_9 = arith.constant 0 : index
    %c0_10 = arith.constant 0 : index
    %11 = vector.load %arg6[%c0_9, %c0_10] : memref<16x1xf32, #tpu.memory_space<vmem>>, vector<16x1xf32>
    %cst_11 = arith.constant dense<0.000000e+00> : vector<16x256xf32>
    %12 = tpu.matmul %10, %9, %cst_11 {dimension_numbers = #tpu.dot_dimension_numbers<[1], [0], [0], [1], [0, 0, 1, 1], [], []>} : vector<16x32xf32>, vector<32x256xf32>, vector<16x256xf32> -> vector<16x256xf32>
    %13 = vector.broadcast %11 : vector<16x1xf32> to vector<16x256xf32>
    %14 = arith.addf %12, %13 : vector<16x256xf32>
    %cst_12 = arith.constant 0.00999999977 : f32
    %15 = vector.broadcast %cst_12 : f32 to vector<16x256xf32>
    %16 = arith.mulf %15, %14 : vector<16x256xf32>
    %17 = arith.maximumf %14, %16 : vector<16x256xf32>
    %c0_13 = arith.constant 0 : index
    %c0_14 = arith.constant 0 : index
    %18 = vector.load %arg7[%c0_13, %c0_14] : memref<4x16xf32, #tpu.memory_space<vmem>>, vector<4x16xf32>
    %c0_15 = arith.constant 0 : index
    %c0_16 = arith.constant 0 : index
    %19 = vector.load %arg8[%c0_15, %c0_16] : memref<4x1xf32, #tpu.memory_space<vmem>>, vector<4x1xf32>
    %cst_17 = arith.constant dense<0.000000e+00> : vector<4x256xf32>
    %20 = tpu.matmul %18, %17, %cst_17 {dimension_numbers = #tpu.dot_dimension_numbers<[1], [0], [0], [1], [0, 0, 1, 1], [], []>} : vector<4x16xf32>, vector<16x256xf32>, vector<4x256xf32> -> vector<4x256xf32>
    %21 = vector.broadcast %19 : vector<4x1xf32> to vector<4x256xf32>
    %22 = arith.addf %20, %21 : vector<4x256xf32>
    %cst_18 = arith.constant 0.00999999977 : f32
    %23 = vector.broadcast %cst_18 : f32 to vector<4x256xf32>
    %24 = arith.mulf %23, %22 : vector<4x256xf32>
    %25 = arith.maximumf %22, %24 : vector<4x256xf32>
    %c0_19 = arith.constant 0 : index
    %c0_20 = arith.constant 0 : index
    %c0_21 = arith.constant 0 : index
    %26 = vector.load %arg9[%c0_19, %c0_20, %c0_21] : memref<1x4x256xf32, #tpu.memory_space<vmem>>, vector<1x4x256xf32>
    %27 = vector.shape_cast %26 : vector<1x4x256xf32> to vector<4x256xf32>
    %28 = vector.shape_cast %25 : vector<4x256xf32> to vector<1x4x256xf32>
    tpu.vector_store %arg9[%c0_19, %c0_20, %c0_21], %28 {strides = array<i32>} : memref<1x4x256xf32, #tpu.memory_space<vmem>>, vector<1x4x256xf32>,
    return
  }
  func.func @transform_0(%arg0: i32, %arg1: i32) -> (i32, i32, i32) {
    %c0_i32 = arith.constant 0 : i32
    %c0_i32_0 = arith.constant 0 : i32
    return %arg0, %c0_i32, %arg1 : i32, i32, i32
  }
  func.func @transform_1(%arg0: i32, %arg1: i32) -> (i32, i32) {
    %c0_i32 = arith.constant 0 : i32
    %c0_i32_0 = arith.constant 0 : i32
    %c0_i32_1 = arith.constant 0 : i32
    return %c0_i32, %c0_i32_0 : i32, i32
  }
  func.func @transform_2(%arg0: i32, %arg1: i32) -> (i32, i32) {
    %c0_i32 = arith.constant 0 : i32
    %c0_i32_0 = arith.constant 0 : i32
    %c0_i32_1 = arith.constant 0 : i32
    return %c0_i32, %c0_i32_0 : i32, i32
  }
  func.func @transform_3(%arg0: i32, %arg1: i32) -> (i32, i32) {
    %c0_i32 = arith.constant 0 : i32
    %c0_i32_0 = arith.constant 0 : i32
    %c0_i32_1 = arith.constant 0 : i32
    return %c0_i32, %c0_i32_0 : i32, i32
  }
  func.func @transform_4(%arg0: i32, %arg1: i32) -> (i32, i32) {
    %c0_i32 = arith.constant 0 : i32
    %c0_i32_0 = arith.constant 0 : i32
    %c0_i32_1 = arith.constant 0 : i32
    return %c0_i32, %c0_i32_0 : i32, i32
  }
  func.func @transform_5(%arg0: i32, %arg1: i32) -> (i32, i32) {
    %c0_i32 = arith.constant 0 : i32
    %c0_i32_0 = arith.constant 0 : i32
    %c0_i32_1 = arith.constant 0 : i32
    return %c0_i32, %c0_i32_0 : i32, i32
  }
  func.func @transform_6(%arg0: i32, %arg1: i32) -> (i32, i32) {
    %c0_i32 = arith.constant 0 : i32
    %c0_i32_0 = arith.constant 0 : i32
    %c0_i32_1 = arith.constant 0 : i32
    return %c0_i32, %c0_i32_0 : i32, i32
  }
  func.func @transform_7(%arg0: i32, %arg1: i32) -> (i32, i32, i32) {
    %c0_i32 = arith.constant 0 : i32
    %c0_i32_0 = arith.constant 0 : i32
    return %arg0, %c0_i32, %arg1 : i32, i32, i32
  }
}

</mosaic_0001>

<llo_original>
// kernel: folding_forward.1
$region0: #{folding_forward.1}
  #allocation0 [shape = 'u32[]', space=smem, size = 0x4, offset = 0x4, fixed_abs, tag = 'smem constant byte address 0x4 - core index']
  #allocation1 [shape = 'u32[72,128]{1,0:T(1,128)}', space=vmem, size = 0x9000, scoped, tag = 'internal scratch']
  %s0 = inlined_call_operand.vmem [shape: f32[2,8,256], index: 0, kind: input, shape index: {}]
  %s1 = inlined_call_operand.vmem [shape: f32[32,8], index: 1, kind: input, shape index: {}]
  %s2 = inlined_call_operand.vmem [shape: f32[32,1], index: 2, kind: input, shape index: {}]
  %s3 = inlined_call_operand.vmem [shape: f32[16,32], index: 3, kind: input, shape index: {}]
  %s4 = inlined_call_operand.vmem [shape: f32[16,1], index: 4, kind: input, shape index: {}]
  %s5 = inlined_call_operand.vmem [shape: f32[4,16], index: 5, kind: input, shape index: {}]
  %s6 = inlined_call_operand.vmem [shape: f32[4,1], index: 6, kind: input, shape index: {}]
  %s7 = inlined_call_operand.hbm [shape: f32[2,4,256], index: 7, kind: output, shape index: {}]
  %s8 = sld [smem:[#allocation0]]
  $region61: #{folding_forward.1} parent=0
    _
  %s10 = ssub.s32 1, %s8
  %s11 = scalar_select 0, %s10, %s8
  $region1: #{folding_forward.1} parent=0
    #allocation2 [shape = 'u8[8192]{0}', space=vmem, size = 0x2000, scoped, tag = 'output window, operand 0']
    #allocation3 [shape = 's32[2]{0}', space=sflag, size = 0x8, scoped, tag = 'scoped memory for folding_forward.1']
    %12 = vsyncpa [#allocation3], 0
    %s13 = scalar_lea.sflag [#allocation3], 1
    %14 = vsyncpa %s13, 0
    loop: start=0, step=1, limit=4
    $region2: #{folding_forward.1} parent=1 // loop_pre_header
      _
    $region3: #{folding_forward.1} parent=1 // loop_header
      %s16 = sphi 0, %s20
      %p17 = scmp.ge.s32.totalorder %s16, 4
      %s23 = sphi 0, %s35
      %s24 = sphi 0, %s31
      %s25 = sphi 0, %s23
      %s26 = sphi 0, %s24
      %s27 = sphi 0, %s25
      %s28 = sphi 0, %s26
      %s40 = sphi 0, %s42
      %s43 = sphi 0, %s40
      %s44 = sphi 0, %s43
      %s60 = sphi 0, %s44
      %s64 = sphi 0, %s64
      %s66 = sphi 0, %s64
      %s67 = sphi 0, %s66
      %s81 = sphi 0, %s67
      %s85 = sphi 0, %s85
      %s87 = sphi 0, %s85
      %s88 = sphi 0, %s87
      %s102 = sphi 0, %s88
      %s106 = sphi 0, %s106
      %s108 = sphi 0, %s106
      %s109 = sphi 0, %s108
      %s123 = sphi 0, %s109
      %s127 = sphi 0, %s127
      %s129 = sphi 0, %s127
      %s130 = sphi 0, %s129
      %s144 = sphi 0, %s130
      %s148 = sphi 0, %s148
      %s150 = sphi 0, %s148
      %s151 = sphi 0, %s150
      %s165 = sphi 0, %s151
      %s169 = sphi 0, %s169
      %s171 = sphi 0, %s169
      %s172 = sphi 0, %s171
      %s186 = sphi 0, %s172
      %s194 = sphi 0, %s196
      %s197 = sphi 0, %s194
      %s198 = sphi 0, %s197
      %s214 = sphi 0, %s198
    $region4: #{folding_forward.1} parent=1 // loop_header_branch
      %19 = sbr.rel (%p17) target = $region8
    $region5: #{folding_forward.1} parent=1 // loop_body
      %s21 = ssub.s32 %s16, 1
      %s22 = ssub.s32 %s16, 2
      %s29 = sadd.s32 1, %s24
      %p30 = scmp.ge.s32.totalorder %s29, 1
      %s31 = scalar_select %p30, 0, %s29
      %s32 = sadd.s32 1, %s23
      %s33 = scalar_select %p30, %s32, %s23
      %p34 = scmp.ge.s32.totalorder %s33, 2
      %s35 = scalar_select %p34, 0, %s33
      %s36 = ssub.s32 %s23, %s35
      %s37 = ssub.s32 %s24, %s31
      %s38 = sor.u32 %s36, %s37
      %p39 = scmp.eq.s32.totalorder %s38, 0
      %s41 = sadd.s32 %s40, 1
      %s42 = scalar_select %p39, %s40, %s41
      %p45 = pneg %p39
      %p46 = scmp.eq.s32.totalorder %s16, 1
      %p47 = por %p45, %p46
      %p48 = scmp.ne.s32.totalorder %s40, %s43
      %p49 = scmp.eq.s32.totalorder %s16, 0
      %p50 = por %p48, %p49
      %p51 = scmp.ne.s32.totalorder %s40, %s43
      %p52 = scmp.eq.s32.totalorder %s21, 1
      %p53 = por %p51, %p52
      %p54 = scmp.ne.s32.totalorder %s43, %s44
      %p55 = scmp.eq.s32.totalorder %s21, 0
      %p56 = por %p54, %p55
      %p57 = scmp.ne.s32.totalorder %s43, %s44
      %p58 = scmp.eq.s32.totalorder %s22, 1
      %p59 = por %p57, %p58
      %p61 = scmp.ne.s32.totalorder %s44, %s60
      %p62 = scmp.eq.s32.totalorder %s22, 0
      %p63 = por %p61, %p62
      %s65 = sadd.s32 %s64, 1
      %p68 = scmp.eq.s32.totalorder %s16, 1
      %p69 = scmp.ne.s32.totalorder %s64, %s66
      %p70 = scmp.eq.s32.totalorder %s16, 0
      %p71 = por %p69, %p70
      %p72 = scmp.ne.s32.totalorder %s64, %s66
      %p73 = scmp.eq.s32.totalorder %s21, 1
      %p74 = por %p72, %p73
      %p75 = scmp.ne.s32.totalorder %s66, %s67
      %p76 = scmp.eq.s32.totalorder %s21, 0
      %p77 = por %p75, %p76
      %p78 = scmp.ne.s32.totalorder %s66, %s67
      %p79 = scmp.eq.s32.totalorder %s22, 1
      %p80 = por %p78, %p79
      %p82 = scmp.ne.s32.totalorder %s67, %s81
      %p83 = scmp.eq.s32.totalorder %s22, 0
      %p84 = por %p82, %p83
      %s86 = sadd.s32 %s85, 1
      %p89 = scmp.eq.s32.totalorder %s16, 1
      %p90 = scmp.ne.s32.totalorder %s85, %s87
      %p91 = scmp.eq.s32.totalorder %s16, 0
      %p92 = por %p90, %p91
      %p93 = scmp.ne.s32.totalorder %s85, %s87
      %p94 = scmp.eq.s32.totalorder %s21, 1
      %p95 = por %p93, %p94
      %p96 = scmp.ne.s32.totalorder %s87, %s88
      %p97 = scmp.eq.s32.totalorder %s21, 0
      %p98 = por %p96, %p97
      %p99 = scmp.ne.s32.totalorder %s87, %s88
      %p100 = scmp.eq.s32.totalorder %s22, 1
      %p101 = por %p99, %p100
      %p103 = scmp.ne.s32.totalorder %s88, %s102
      %p104 = scmp.eq.s32.totalorder %s22, 0
      %p105 = por %p103, %p104
      %s107 = sadd.s32 %s106, 1
      %p110 = scmp.eq.s32.totalorder %s16, 1
      %p111 = scmp.ne.s32.totalorder %s106, %s108
      %p112 = scmp.eq.s32.totalorder %s16, 0
      %p113 = por %p111, %p112
      %p114 = scmp.ne.s32.totalorder %s106, %s108
      %p115 = scmp.eq.s32.totalorder %s21, 1
      %p116 = por %p114, %p115
      %p117 = scmp.ne.s32.totalorder %s108, %s109
      %p118 = scmp.eq.s32.totalorder %s21, 0
      %p119 = por %p117, %p118
      %p120 = scmp.ne.s32.totalorder %s108, %s109
      %p121 = scmp.eq.s32.totalorder %s22, 1
      %p122 = por %p120, %p121
      %p124 = scmp.ne.s32.totalorder %s109, %s123
      %p125 = scmp.eq.s32.totalorder %s22, 0
      %p126 = por %p124, %p125
      %s128 = sadd.s32 %s127, 1
      %p131 = scmp.eq.s32.totalorder %s16, 1
      %p132 = scmp.ne.s32.totalorder %s127, %s129
      %p133 = scmp.eq.s32.totalorder %s16, 0
      %p134 = por %p132, %p133
      %p135 = scmp.ne.s32.totalorder %s127, %s129
      %p136 = scmp.eq.s32.totalorder %s21, 1
      %p137 = por %p135, %p136
      %p138 = scmp.ne.s32.totalorder %s129, %s130
      %p139 = scmp.eq.s32.totalorder %s21, 0
      %p140 = por %p138, %p139
      %p141 = scmp.ne.s32.totalorder %s129, %s130
      %p142 = scmp.eq.s32.totalorder %s22, 1
      %p143 = por %p141, %p142
      %p145 = scmp.ne.s32.totalorder %s130, %s144
      %p146 = scmp.eq.s32.totalorder %s22, 0
      %p147 = por %p145, %p146
      %s149 = sadd.s32 %s148, 1
      %p152 = scmp.eq.s32.totalorder %s16, 1
      %p153 = scmp.ne.s32.totalorder %s148, %s150
      %p154 = scmp.eq.s32.totalorder %s16, 0
      %p155 = por %p153, %p154
      %p156 = scmp.ne.s32.totalorder %s148, %s150
      %p157 = scmp.eq.s32.totalorder %s21, 1
      %p158 = por %p156, %p157
      %p159 = scmp.ne.s32.totalorder %s150, %s151
      %p160 = scmp.eq.s32.totalorder %s21, 0
      %p161 = por %p159, %p160
      %p162 = scmp.ne.s32.totalorder %s150, %s151
      %p163 = scmp.eq.s32.totalorder %s22, 1
      %p164 = por %p162, %p163
      %p166 = scmp.ne.s32.totalorder %s151, %s165
      %p167 = scmp.eq.s32.totalorder %s22, 0
      %p168 = por %p166, %p167
      %s170 = sadd.s32 %s169, 1
      %p173 = scmp.eq.s32.totalorder %s16, 1
      %p174 = scmp.ne.s32.totalorder %s169, %s171
      %p175 = scmp.eq.s32.totalorder %s16, 0
      %p176 = por %p174, %p175
      %p177 = scmp.ne.s32.totalorder %s169, %s171
      %p178 = scmp.eq.s32.totalorder %s21, 1
      %p179 = por %p177, %p178
      %p180 = scmp.ne.s32.totalorder %s171, %s172
      %p181 = scmp.eq.s32.totalorder %s21, 0
      %p182 = por %p180, %p181
      %p183 = scmp.ne.s32.totalorder %s171, %s172
      %p184 = scmp.eq.s32.totalorder %s22, 1
      %p185 = por %p183, %p184
      %p187 = scmp.ne.s32.totalorder %s172, %s186
      %p188 = scmp.eq.s32.totalorder %s22, 0
      %p189 = por %p187, %p188
      %s190 = ssub.s32 %s23, %s35
      %s191 = ssub.s32 %s24, %s31
      %s192 = sor.u32 %s190, %s191
      %p193 = scmp.eq.s32.totalorder %s192, 0
      %s195 = sadd.s32 %s194, 1
      %s196 = scalar_select %p193, %s194, %s195
      %p199 = pneg %p193
      %p200 = scmp.eq.s32.totalorder %s16, 1
      %p201 = por %p199, %p200
      %p202 = scmp.ne.s32.totalorder %s194, %s197
      %p203 = scmp.eq.s32.totalorder %s16, 0
      %p204 = por %p202, %p203
      %p205 = scmp.ne.s32.totalorder %s194, %s197
      %p206 = scmp.eq.s32.totalorder %s21, 1
      %p207 = por %p205, %p206
      %p208 = scmp.ne.s32.totalorder %s197, %s198
      %p209 = scmp.eq.s32.totalorder %s21, 0
      %p210 = por %p208, %p209
      %p211 = scmp.ne.s32.totalorder %s197, %s198
      %p212 = scmp.eq.s32.totalorder %s22, 1
      %p213 = por %p211, %p212
      %p215 = scmp.ne.s32.totalorder %s198, %s214
      %p216 = scmp.eq.s32.totalorder %s22, 0
      %p217 = por %p215, %p216
      %p218 = scmp.le.s32.totalorder 1, %s16
      %p219 = scmp.lt.s32.totalorder %s16, 3
      %p220 = pnand %p218, %p219
      %p221 = pneg %p220
      // Predicated region
      $region9: #{folding_forward.1} parent=5 // pred_check
        _
      $region10: #{folding_forward.1} parent=5 // pred_check_branch
        %223 = sbr.rel (%p220) target = $region12
      $region11: #{folding_forward.1} parent=5 // pred_region
        %s224 = ssub.s32 %s16, 1
        // Predicated region
        $region13: #{folding_forward.1} parent=11 // pred_check
          %p225 = pneg %p77
        $region14: #{folding_forward.1} parent=11 // pred_check_branch
          %227 = sbr.rel (%p225) target = $region16
        $region15: #{folding_forward.1} parent=11 // pred_region
          _
        $region16: #{folding_forward.1} parent=11 // pred_fallthru
          _
        // Predicated region
        $region17: #{folding_forward.1} parent=11 // pred_check
          %p228 = pneg %p98
        $region18: #{folding_forward.1} parent=11 // pred_check_branch
          %230 = sbr.rel (%p228) target = $region20
        $region19: #{folding_forward.1} parent=11 // pred_region
          _
        $region20: #{folding_forward.1} parent=11 // pred_fallthru
          _
        // Predicated region
        $region21: #{folding_forward.1} parent=11 // pred_check
          %p231 = pneg %p119
        $region22: #{folding_forward.1} parent=11 // pred_check_branch
          %233 = sbr.rel (%p231) target = $region24
        $region23: #{folding_forward.1} parent=11 // pred_region
          _
        $region24: #{folding_forward.1} parent=11 // pred_fallthru
          _
        // Predicated region
        $region25: #{folding_forward.1} parent=11 // pred_check
          %p234 = pneg %p140
        $region26: #{folding_forward.1} parent=11 // pred_check_branch
          %236 = sbr.rel (%p234) target = $region28
        $region27: #{folding_forward.1} parent=11 // pred_region
          _
        $region28: #{folding_forward.1} parent=11 // pred_fallthru
          _
        // Predicated region
        $region29: #{folding_forward.1} parent=11 // pred_check
          %p237 = pneg %p161
        $region30: #{folding_forward.1} parent=11 // pred_check_branch
          %239 = sbr.rel (%p237) target = $region32
        $region31: #{folding_forward.1} parent=11 // pred_region
          _
        $region32: #{folding_forward.1} parent=11 // pred_fallthru
          _
        // Predicated region
        $region33: #{folding_forward.1} parent=11 // pred_check
          %p240 = pneg %p182
        $region34: #{folding_forward.1} parent=11 // pred_check_branch
          %242 = sbr.rel (%p240) target = $region36
        $region35: #{folding_forward.1} parent=11 // pred_region
          _
        $region36: #{folding_forward.1} parent=11 // pred_fallthru
          _
      $region12: #{folding_forward.1} parent=5 // pred_fallthru
        _
      %p243 = scmp.lt.s32.totalorder %s16, 2
      // Predicated region
      $region37: #{folding_forward.1} parent=5 // pred_check
        %p244 = pneg %p243
      $region38: #{folding_forward.1} parent=5 // pred_check_branch
        %246 = sbr.rel (%p244) target = $region40
      $region39: #{folding_forward.1} parent=5 // pred_region
        // Predicated region
        $region41: #{folding_forward.1} parent=39 // pred_check
          %p247 = pneg %p50
        $region42: #{folding_forward.1} parent=39 // pred_check_branch
          %249 = sbr.rel (%p247) target = $region44
        $region43: #{folding_forward.1} parent=39 // pred_region
          %s250 = smul.u32 2, %s24
          %p251 = scmp.lt.s32.totalorder %s23, 1
          %s252 = scalar_select %p251, %s23, 1
          %p253 = scmp.lt.s32.totalorder %s250, 1
          %s254 = scalar_select %p253, %s250, 1
          %s255 = smul.addr %s252, 2
          %s256 = sadd.s32 %s254, %s255
          %s257 = smul.addr %s256, 8
          %s258 = scalar_lea.vmem %s0, %s257
          %s259 = smul.u32 2, %s24
        $region44: #{folding_forward.1} parent=39 // pred_fallthru
          _
      $region40: #{folding_forward.1} parent=5 // pred_fallthru
        _
      %p260 = scmp.le.s32.totalorder 1, %s16
      %p261 = scmp.lt.s32.totalorder %s16, 3
      %p262 = pnand %p260, %p261
      %p263 = pneg %p262
      // Predicated region
      $region45: #{folding_forward.1} parent=5 // pred_check
        _
      $region46: #{folding_forward.1} parent=5 // pred_check_branch
        %265 = sbr.rel (%p262) target = $region48
      $region47: #{folding_forward.1} parent=5 // pred_region
        %s266 = ssub.s32 %s16, 1
        %s267 = smul.u32 2, %s26
        %p268 = scmp.lt.s32.totalorder %s25, 1
        %s269 = scalar_select %p268, %s25, 1
        %p270 = scmp.lt.s32.totalorder %s267, 1
        %s271 = scalar_select %p270, %s267, 1
        %s272 = smul.addr %s269, 2
        %s273 = sadd.s32 %s271, %s272
        %s274 = smul.addr %s273, 8
        %s275 = scalar_lea.vmem %s0, %s274
        %p276 = pneg %p56
        %p277 = pneg %p53
        %p278 = pneg %p77
        %p279 = pneg %p74
        %p280 = pneg %p98
        %p281 = pneg %p95
        %p282 = pneg %p119
        %p283 = pneg %p116
        %p284 = pneg %p140
        %p285 = pneg %p137
        %p286 = pneg %p161
        %p287 = pneg %p158
        %p288 = pneg %p182
        %p289 = pneg %p179
        %p290 = pneg %p210
        %p291 = pneg %p207
        %s292 = sand.u32 %s197, 1
        %s293 = scalar_lea.sflag [#allocation3], %s292
        %s294 = sand.u32 %s197, 1
        %s295 = smul.addr %s294, 8
        %s296 = scalar_lea.vmem [#allocation2], %s295
        %s297 = smul.u32 2, %s26
        %p298 = scmp.lt.s32.totalorder %s25, 1
        %s299 = scalar_select %p298, %s25, 1
        %p300 = scmp.lt.s32.totalorder %s297, 1
        %s301 = scalar_select %p300, %s297, 1
        %s302 = smul.addr %s299, 2
        %s303 = sadd.s32 %s301, %s302
        %s304 = smul.addr %s303, 8
        %s305 = scalar_lea.vmem %s0, %s304
        %s306 = smul.u32 2, %s26
        %s307 = smul.u32 2, %s26
        %v308 = vld [vmem:[%s305] sm:$0xff]
        %v309 = vld [vmem:[%s305 + $0x8] sm:$0xff]
        %v310 = vld [vmem:[%s1] sm:$0xff]
        %v311 = vld [vmem:[%s1 + $0x8] sm:$0xff]
        %v312 = vld [vmem:[%s1 + $0x10] sm:$0xff]
        %v313 = vld [vmem:[%s1 + $0x18] sm:$0xff]
        %v314 = vld [vmem:[%s2] sm:$0xff]
        %v315 = vld [vmem:[%s2 + $0x8] sm:$0xff]
        %v316 = vld [vmem:[%s2 + $0x10] sm:$0xff]
        %v317 = vld [vmem:[%s2 + $0x18] sm:$0xff]
        %319 = vset.pattern.permute.xlu0 0
        %320 = vperm.xlu0 %319, %v314
        %v321 = vpop.permute.xlu0 %320
        %324 = vset.pattern.permute.xlu0 0
        %325 = vperm.xlu0 %324, %v315
        %v326 = vpop.permute.xlu0 %325
        %329 = vset.pattern.permute.xlu0 0
        %330 = vperm.xlu0 %329, %v316
        %v331 = vpop.permute.xlu0 %330
        %334 = vset.pattern.permute.xlu0 0
        %335 = vperm.xlu0 %334, %v317
        %v336 = vpop.permute.xlu0 %335
        %vm338 = vcmask 64512
        %v340 = vsel %vm338, %v310, 0
        %v343 = vsel %vm338, %v311, 0
        %v346 = vsel %vm338, %v312, 0
        %v349 = vsel %vm338, %v313, 0
        %351 = vmatpush.msra.mxu0 0.0
        %352 = vmatpush.msra.mxu0 0.0
        %353 = vmatpush.msra.mxu0 0.0
        %354 = vmatpush.msra.mxu0 0.0
        %355 = vmatpush.msra.mxu0 0.0
        %356 = vmatpush.msra.mxu0 0.0
        %357 = vmatpush.msra.mxu0 0.0
        %358 = vmatpush.msra.mxu0 0.0
        %359 = vmatpush.msra.mxu0 0.0
        %360 = vmatpush.msra.mxu0 0.0
        %361 = vmatpush.msra.mxu0 0.0
        %362 = vmatpush.msra.mxu0 0.0
        %363 = vmatpush.msra.mxu0 0.0
        %364 = vmatpush.msra.mxu0 0.0
        %365 = vmatpush.msra.mxu0 0.0
        %366 = vmatpush.msra.mxu0 %v308
        %367 = vmatmul.f32.gmra.mxu0 %v340
        %v368 = vpop.f32.mrf.mxu0
        %v369 = vadd.f32 %v321, %v368
        %370 = vmatmul.f32.gmra.mxu0 %v343
        %v371 = vpop.f32.mrf.mxu0
        %v372 = vadd.f32 %v326, %v371
        %373 = vmatmul.f32.gmra.mxu0 %v346
        %v374 = vpop.f32.mrf.mxu0
        %v375 = vadd.f32 %v331, %v374
        %376 = vmatmul.f32.gmra.mxu0 %v349
        %v377 = vpop.f32.mrf.mxu0
        %v378 = vadd.f32 %v336, %v377
        %379 = vdwg.mxu0
        %380 = vmatpush.msra.mxu0 0.0
        %381 = vmatpush.msra.mxu0 0.0
        %382 = vmatpush.msra.mxu0 0.0
        %383 = vmatpush.msra.mxu0 0.0
        %384 = vmatpush.msra.mxu0 0.0
        %385 = vmatpush.msra.mxu0 0.0
        %386 = vmatpush.msra.mxu0 0.0
        %387 = vmatpush.msra.mxu0 0.0
        %388 = vmatpush.msra.mxu0 0.0
        %389 = vmatpush.msra.mxu0 0.0
        %390 = vmatpush.msra.mxu0 0.0
        %391 = vmatpush.msra.mxu0 0.0
        %392 = vmatpush.msra.mxu0 0.0
        %393 = vmatpush.msra.mxu0 0.0
        %394 = vmatpush.msra.mxu0 0.0
        %395 = vmatpush.msra.mxu0 %v309
        %396 = vmatmul.f32.gmra.mxu0 %v340
        %v397 = vpop.f32.mrf.mxu0
        %v398 = vadd.f32 %v321, %v397
        %399 = vmatmul.f32.gmra.mxu0 %v343
        %v400 = vpop.f32.mrf.mxu0
        %v401 = vadd.f32 %v326, %v400
        %402 = vmatmul.f32.gmra.mxu0 %v346
        %v403 = vpop.f32.mrf.mxu0
        %v404 = vadd.f32 %v331, %v403
        %405 = vmatmul.f32.gmra.mxu0 %v349
        %v406 = vpop.f32.mrf.mxu0
        %v407 = vadd.f32 %v336, %v406
        %408 = vdwg.mxu0
        %v409 = vmul.f32 %v369, 0.01
        %v410 = vmul.f32 %v398, 0.01
        %v411 = vmul.f32 %v372, 0.01
        %v412 = vmul.f32 %v401, 0.01
        %v413 = vmul.f32 %v375, 0.01
        %v414 = vmul.f32 %v404, 0.01
        %v415 = vmul.f32 %v378, 0.01
        %v416 = vmul.f32 %v407, 0.01
        %v417 = vmax.f32 %v369, %v409
        %v418 = vmax.f32 %v398, %v410
        %v419 = vmax.f32 %v372, %v411
        %v420 = vmax.f32 %v401, %v412
        %v421 = vmax.f32 %v375, %v413
        %v422 = vmax.f32 %v404, %v414
        %v423 = vmax.f32 %v378, %v415
        %v424 = vmax.f32 %v407, %v416
        %v425 = vld [vmem:[%s3] sm:$0xff]
        %v426 = vld [vmem:[%s3 + $0x8] sm:$0xff]
        %v427 = vld [vmem:[%s4] sm:$0xff]
        %v428 = vld [vmem:[%s4 + $0x8] sm:$0xff]
        %430 = vset.pattern.permute.xlu0 0
        %431 = vperm.xlu0 %430, %v427
        %v432 = vpop.permute.xlu0 %431
        %435 = vset.pattern.permute.xlu0 0
        %436 = vperm.xlu0 %435, %v428
        %v437 = vpop.permute.xlu0 %436
        %vm439 = vcmask 261120
        %v441 = vsel %vm439, %v425, 0
        %v444 = vsel %vm439, %v426, 0
        %446 = vmatpush.msra.mxu0 0.0
        %447 = vmatpush.msra.mxu0 0.0
        %448 = vmatpush.msra.mxu0 0.0
        %449 = vmatpush.msra.mxu0 0.0
        %450 = vmatpush.msra.mxu0 0.0
        %451 = vmatpush.msra.mxu0 0.0
        %452 = vmatpush.msra.mxu0 0.0
        %453 = vmatpush.msra.mxu0 0.0
        %454 = vmatpush.msra.mxu0 0.0
        %455 = vmatpush.msra.mxu0 0.0
        %456 = vmatpush.msra.mxu0 0.0
        %457 = vmatpush.msra.mxu0 0.0
        %458 = vmatpush.msra.mxu0 %v423
        %459 = vmatpush.msra.mxu0 %v421
        %460 = vmatpush.msra.mxu0 %v419
        %461 = vmatpush.msra.mxu0 %v417
        %462 = vmatmul.f32.gmra.mxu0 %v441
        %v463 = vpop.f32.mrf.mxu0
        %v464 = vadd.f32 %v432, %v463
        %465 = vmatmul.f32.gmra.mxu0 %v444
        %v466 = vpop.f32.mrf.mxu0
        %v467 = vadd.f32 %v437, %v466
        %468 = vdwg.mxu0
        %469 = vmatpush.msra.mxu0 0.0
        %470 = vmatpush.msra.mxu0 0.0
        %471 = vmatpush.msra.mxu0 0.0
        %472 = vmatpush.msra.mxu0 0.0
        %473 = vmatpush.msra.mxu0 0.0
        %474 = vmatpush.msra.mxu0 0.0
        %475 = vmatpush.msra.mxu0 0.0
        %476 = vmatpush.msra.mxu0 0.0
        %477 = vmatpush.msra.mxu0 0.0
        %478 = vmatpush.msra.mxu0 0.0
        %479 = vmatpush.msra.mxu0 0.0
        %480 = vmatpush.msra.mxu0 0.0
        %481 = vmatpush.msra.mxu0 %v424
        %482 = vmatpush.msra.mxu0 %v422
        %483 = vmatpush.msra.mxu0 %v420
        %484 = vmatpush.msra.mxu0 %v418
        %485 = vmatmul.f32.gmra.mxu0 %v441
        %v486 = vpop.f32.mrf.mxu0
        %v487 = vadd.f32 %v432, %v486
        %488 = vmatmul.f32.gmra.mxu0 %v444
        %v489 = vpop.f32.mrf.mxu0
        %v490 = vadd.f32 %v437, %v489
        %491 = vdwg.mxu0
        %v492 = vmul.f32 %v464, 0.01
        %v493 = vmul.f32 %v487, 0.01
        %v494 = vmul.f32 %v467, 0.01
        %v495 = vmul.f32 %v490, 0.01
        %v496 = vmax.f32 %v464, %v492
        %v497 = vmax.f32 %v487, %v493
        %v498 = vmax.f32 %v467, %v494
        %v499 = vmax.f32 %v490, %v495
        %v500 = vld [vmem:[%s5] sm:$0xf]
        %v501 = vld [vmem:[%s6] sm:$0xf]
        %503 = vset.pattern.permute.xlu0 0
        %504 = vperm.xlu0 %503, %v501
        %v505 = vpop.permute.xlu0 %504
        %vm507 = vcmask 130048
        %v509 = vsel %vm507, %v500, 0
        %511 = vmatpush.msra.mxu0 0.0
        %512 = vmatpush.msra.mxu0 0.0
        %513 = vmatpush.msra.mxu0 0.0
        %514 = vmatpush.msra.mxu0 0.0
        %515 = vmatpush.msra.mxu0 0.0
        %516 = vmatpush.msra.mxu0 0.0
        %517 = vmatpush.msra.mxu0 0.0
        %518 = vmatpush.msra.mxu0 0.0
        %519 = vmatpush.msra.mxu0 0.0
        %520 = vmatpush.msra.mxu0 0.0
        %521 = vmatpush.msra.mxu0 0.0
        %522 = vmatpush.msra.mxu0 0.0
        %523 = vmatpush.msra.mxu0 0.0
        %524 = vmatpush.msra.mxu0 0.0
        %525 = vmatpush.msra.mxu0 %v498
        %526 = vmatpush.msra.mxu0 %v496
        %527 = vmatmul.f32.gmra.mxu0 %v509
        %v528 = vpop.f32.mrf.mxu0
        %v529 = vadd.f32 %v505, %v528
        %530 = vdwg.mxu0
        %531 = vmatpush.msra.mxu0 0.0
        %532 = vmatpush.msra.mxu0 0.0
        %533 = vmatpush.msra.mxu0 0.0
        %534 = vmatpush.msra.mxu0 0.0
        %535 = vmatpush.msra.mxu0 0.0
        %536 = vmatpush.msra.mxu0 0.0
        %537 = vmatpush.msra.mxu0 0.0
        %538 = vmatpush.msra.mxu0 0.0
        %539 = vmatpush.msra.mxu0 0.0
        %540 = vmatpush.msra.mxu0 0.0
        %541 = vmatpush.msra.mxu0 0.0
        %542 = vmatpush.msra.mxu0 0.0
        %543 = vmatpush.msra.mxu0 0.0
        %544 = vmatpush.msra.mxu0 0.0
        %545 = vmatpush.msra.mxu0 %v499
        %546 = vmatpush.msra.mxu0 %v497
        %547 = vmatmul.f32.gmra.mxu0 %v509
        %v548 = vpop.f32.mrf.mxu0
        %v549 = vadd.f32 %v505, %v548
        %550 = vdwg.mxu0
        %v551 = vmul.f32 %v529, 0.01
        %v552 = vmul.f32 %v549, 0.01
        %v553 = vmax.f32 %v529, %v551
        %v554 = vmax.f32 %v549, %v552
        %v557 = vrot.slane %v554, 4
        %vm558 = vcmask 1043456
        %v559 = vsel %vm558, %v553, %v557
        %561 = vst [vmem:[%s296] sm:$0xff] %v559
        %s562 = sand.u32 %s197, 1
        %s563 = scalar_lea.sflag [#allocation3], %s562
        %s564 = sand.u32 %s197, 1
        %s565 = smul.addr %s564, 8
        %s566 = scalar_lea.vmem [#allocation2], %s565
        // Predicated region
        $region49: #{folding_forward.1} parent=47 // pred_check
          %p567 = pneg %p207
        $region50: #{folding_forward.1} parent=47 // pred_check_branch
          %569 = sbr.rel (%p567) target = $region52
        $region51: #{folding_forward.1} parent=47 // pred_region
          %s570 = smul.u32 2, %s26
          %572 = vsyncadd %s563, 0
          %s573 = smul.addr %s25, 2
          %s574 = sadd.s32 %s570, %s573
          %s575 = smul.addr %s574, 4
          %s576 = scalar_lea.hbm %s7, %s575
          %s578 = sshll.u32 %s566, 4
          %s579 = int_to_ptr.vmem [resolvable:$true] %s578
          %s580 = sshll.u32 %s576, 4
          %s581 = int_to_ptr.hbm [resolvable:$true] %s580
          %583 = dma.vmem_to_hbm [thread:$0]  %s579, 128, %s581, %s563
        $region52: #{folding_forward.1} parent=47 // pred_fallthru
          _
      $region48: #{folding_forward.1} parent=5 // pred_fallthru
        _
      %p584 = scmp.le.s32.totalorder 2, %s16
      // Predicated region
      $region53: #{folding_forward.1} parent=5 // pred_check
        %p585 = pneg %p584
      $region54: #{folding_forward.1} parent=5 // pred_check_branch
        %587 = sbr.rel (%p585) target = $region56
      $region55: #{folding_forward.1} parent=5 // pred_region
        %s588 = ssub.s32 %s16, 2
        // Predicated region
        $region57: #{folding_forward.1} parent=55 // pred_check
          %p589 = pneg %p213
        $region58: #{folding_forward.1} parent=55 // pred_check_branch
          %591 = sbr.rel (%p589) target = $region60
        $region59: #{folding_forward.1} parent=55 // pred_region
          %s592 = sand.u32 %s198, 1
          %s593 = scalar_lea.sflag [#allocation3], %s592
          %s594 = sand.u32 %s198, 1
          %s595 = smul.addr %s594, 8
          %s596 = scalar_lea.vmem [#allocation2], %s595
          %598 = dma.done %s593, 128
        $region60: #{folding_forward.1} parent=55 // pred_fallthru
          _
      $region56: #{folding_forward.1} parent=5 // pred_fallthru
        _
    $region6: #{folding_forward.1} parent=1 // loop_footer
      %s20 = sadd.s32 1, %s16
    $region7: #{folding_forward.1} parent=1 // loop_footer_branch
      %15 = sbr.rel target = $region3
    $region8: #{folding_forward.1} parent=1 // loop_exit
      _
    %599 = vsyncpa [#allocation3], 1
    %s600 = scalar_lea.sflag [#allocation3], 1
    %601 = vsyncpa %s600, 1

</llo_original>
